<compile_context>
chip_gen: v7x
topology: tpu7x:2x2x1
jax: 0.10.0
libtpu: 0.0.40
codegen_flags: <defaults>
</compile_context>

<pallas_src>
import jax
import jax.numpy as jnp
from jax.experimental import pallas as pl
from jax.experimental.pallas import tpu as pltpu


# ----------------------------------------------------------------------------
# Pallas kernel: fused coordinate projection + add (pure VPU, elementwise)
# ----------------------------------------------------------------------------

def _pos_encode_kernel(x_ref, gxy_ref, wxy_ref, b_ref, o_ref):
    # x_ref  : (t_r, t_hw)  tile of x flattened to (B*C, H*W)
    # gxy_ref: (2,  t_hw)   row 0 = grid_x (linspace over H), row 1 = grid_y (over W)
    # wxy_ref: (t_r, 2)     per-row 1x1-conv weights  [wx, wy]
    # b_ref  : (t_r, 1)     per-row 1x1-conv bias
    gx = gxy_ref[0:1, :]                      # (1, t_hw)
    gy = gxy_ref[1:2, :]                      # (1, t_hw)
    wx = wxy_ref[:, 0:1]                      # (t_r, 1)
    wy = wxy_ref[:, 1:2]                      # (t_r, 1)
    pos = wx * gx + wy * gy + b_ref[...]      # (t_r, t_hw) f32
    o_ref[...] = (x_ref[...].astype(jnp.float32) + pos).astype(o_ref.dtype)


# ----------------------------------------------------------------------------
# Tile selection: bytes-based budget, (8,128)-aligned, >= 2 parallel steps
# ----------------------------------------------------------------------------

def _choose_tiles(R, HW, dtype_bytes, budget_bytes=2 * 1024 * 1024):
    LANE, SUB = 128, 8
    hw_ceil = ((HW + LANE - 1) // LANE) * LANE        # padded lane ceiling

    # Rows: take all B*C rows unless a single 128-lane column already busts
    # the budget (huge B*C), then split rows on a multiple of 8.
    if R * LANE * dtype_bytes <= budget_bytes:
        t_r = R
    else:
        t_r = max(SUB, (budget_bytes // (dtype_bytes * LANE)) // SUB * SUB)
        t_r = min(t_r, R)

    # Lanes: fill the remaining byte budget, multiple of 128.
    t_hw = max(LANE, (budget_bytes // (dtype_bytes * max(t_r, 1))) // LANE * LANE)
    t_hw = min(t_hw, hw_ceil)
    if HW <= LANE:                                     # tiny spatial extent
        t_hw = HW

    # v7x has 2 TensorCores: make sure the parallel grid has >= 2 steps.
    def _steps(tr, th):
        return (-(-R // tr)) * (-(-HW // th))
    if _steps(t_r, t_hw) < 2:
        if t_hw > LANE:
            t_hw = max(LANE, (t_hw // 2) // LANE * LANE)
        elif t_r == R and R >= 2 * SUB:
            t_r = max(SUB, (R // 2) // SUB * SUB)
    return t_r, t_hw


# ----------------------------------------------------------------------------
# Wrapper
# ----------------------------------------------------------------------------

def euclidean_position_encoding(x, pe_w, pe_b):
    """x: (B, C, H, W); pe_w: (C, 2, 1, 1) Conv2d(2, C, 1) weight; pe_b: (C,) bias."""
    B, C, H, W = x.shape
    R, HW = B * C, H * W
    out_dtype = x.dtype
    dtype_bytes = jnp.dtype(out_dtype).itemsize

    x_flat = x.reshape(R, HW)                          # lane-dense, free reshape

    # Coordinate rows (tiny, constant-folded under jit); matches torch.linspace
    # endpoint semantics exactly (H==1 / W==1 -> [0.0]).
    gx = jnp.linspace(0.0, 1.0, H, dtype=jnp.float32)
    gy = jnp.linspace(0.0, 1.0, W, dtype=jnp.float32)
    gx_flat = jnp.broadcast_to(gx[:, None], (H, W)).reshape(HW)
    gy_flat = jnp.broadcast_to(gy[None, :], (H, W)).reshape(HW)
    gxy = jnp.stack([gx_flat, gy_flat], axis=0)        # (2, HW) f32

    # Per-row (b, c) parameters; row r = b*C + c  ->  channel c = r % C.
    w2 = pe_w.reshape(C, 2).astype(jnp.float32)        # (C, 2)
    wxy = jnp.tile(w2, (B, 1))                         # (R, 2)
    bb = jnp.tile(pe_b.reshape(C, 1).astype(jnp.float32), (B, 1))   # (R, 1)

    t_r, t_hw = _choose_tiles(R, HW, dtype_bytes)
    grid = (pl.cdiv(R, t_r), pl.cdiv(HW, t_hw))

    y = pl.pallas_call(
        _pos_encode_kernel,
        out_shape=jax.ShapeDtypeStruct((R, HW), out_dtype),
        grid_spec=pltpu.PrefetchScalarGridSpec(
            num_scalar_prefetch=0,
            grid=grid,
            in_specs=[
                pl.BlockSpec((t_r, t_hw), lambda r, j: (r, j)),   # x tile
                pl.BlockSpec((2, t_hw), lambda r, j: (0, j)),     # [gx; gy]
                pl.BlockSpec((t_r, 2), lambda r, j: (r, 0)),      # [wx, wy]
                pl.BlockSpec((t_r, 1), lambda r, j: (r, 0)),      # bias
            ],
            out_specs=pl.BlockSpec((t_r, t_hw), lambda r, j: (r, j)),
        ),
        compiler_params=pltpu.CompilerParams(
            dimension_semantics=("parallel", "parallel"),
            vmem_limit_bytes=32 * 1024 * 1024),
    )(x_flat, gxy, wxy, bb)

    return y.reshape(B, C, H, W)


# ----------------------------------------------------------------------------
# Pure-JAX reference (mirrors the PyTorch forward exactly)
# ----------------------------------------------------------------------------

def reference_forward(x, pe_w, pe_b):
    B, C, H, W = x.shape
    gx = jnp.linspace(0.0, 1.0, H, dtype=jnp.float32)
    gy = jnp.linspace(0.0, 1.0, W, dtype=jnp.float32)
    mesh = jnp.stack(jnp.meshgrid(gx, gy, indexing="ij"), axis=0)      # (2, H, W)
    w = pe_w.reshape(C, 2)
    pos = jnp.einsum("ck,khw->chw", w, mesh) + pe_b[:, None, None]     # 1x1 conv
    return (x.astype(jnp.float32) + pos[None]).astype(x.dtype)


# ----------------------------------------------------------------------------

if __name__ == "__main__":
    B, dmodel, H, W = 2, 8, 16, 16

    key = jax.random.PRNGKey(0)
    k0, k1, k2 = jax.random.split(key, 3)
    x = jax.random.normal(k0, (B, dmodel, H, W), jnp.float32)
    # Conv2d(coords_dim=2, dmodel, kernel_size=1) parameters.
    pe_w = 0.3 * jax.random.normal(k1, (dmodel, 2, 1, 1), jnp.float32)
    pe_b = 0.1 * jax.random.normal(k2, (dmodel,), jnp.float32)

    fwd = jax.jit(euclidean_position_encoding)
    y = fwd(x, pe_w, pe_b)
    jax.block_until_ready(y)
    assert y.shape == (B, dmodel, H, W)
    assert y.dtype == x.dtype

    y_ref = reference_forward(x, pe_w, pe_b)
    assert bool(jnp.allclose(y, y_ref, atol=1e-5, rtol=1e-5))

    print("KERNEL_OK")
</pallas_src>

<mosaic_0001>
module attributes {stable_mosaic.version = 11 : i64} {
  func.func @_pos_encode_kernel(%arg0: i32, %arg1: i32, %arg2: memref<16x128xf32, #tpu.memory_space<vmem>>, %arg3: memref<2x128xf32, #tpu.memory_space<vmem>>, %arg4: memref<16x2xf32, #tpu.memory_space<vmem>>, %arg5: memref<16x1xf32, #tpu.memory_space<vmem>>, %arg6: memref<16x128xf32, #tpu.memory_space<vmem>>) attributes {dimension_semantics = [#tpu.dimension_semantics<parallel>, #tpu.dimension_semantics<parallel>], iteration_bounds = array<i64: 1, 2>, scalar_prefetch = 0 : i64, scratch_operands = 0 : i64, tpu.core_type = #tpu.core_type<tc>, window_params = [{transform_indices = @transform_0, window_bounds = array<i64: 16, 128>}, {transform_indices = @transform_1, window_bounds = array<i64: 2, 128>}, {transform_indices = @transform_2, window_bounds = array<i64: 16, 2>}, {transform_indices = @transform_3, window_bounds = array<i64: 16, 1>}, {transform_indices = @transform_4, window_bounds = array<i64: 16, 128>}]} {
    %c0 = arith.constant 0 : index
    %c0_0 = arith.constant 0 : index
    %0 = vector.load %arg3[%c0, %c0_0] : memref<2x128xf32, #tpu.memory_space<vmem>>, vector<1x128xf32>
    %c1 = arith.constant 1 : index
    %c0_1 = arith.constant 0 : index
    %1 = vector.load %arg3[%c1, %c0_1] : memref<2x128xf32, #tpu.memory_space<vmem>>, vector<1x128xf32>
    %c0_2 = arith.constant 0 : index
    %c0_3 = arith.constant 0 : index
    %2 = vector.load %arg4[%c0_2, %c0_3] : memref<16x2xf32, #tpu.memory_space<vmem>>, vector<16x1xf32>
    %c0_4 = arith.constant 0 : index
    %c1_5 = arith.constant 1 : index
    %3 = vector.load %arg4[%c0_4, %c1_5] : memref<16x2xf32, #tpu.memory_space<vmem>>, vector<16x1xf32>
    %4 = vector.broadcast %2 : vector<16x1xf32> to vector<16x128xf32>
    %5 = vector.broadcast %0 : vector<1x128xf32> to vector<16x128xf32>
    %6 = arith.mulf %4, %5 : vector<16x128xf32>
    %7 = vector.broadcast %3 : vector<16x1xf32> to vector<16x128xf32>
    %8 = vector.broadcast %1 : vector<1x128xf32> to vector<16x128xf32>
    %9 = arith.mulf %7, %8 : vector<16x128xf32>
    %10 = arith.addf %6, %9 : vector<16x128xf32>
    %c0_6 = arith.constant 0 : index
    %c0_7 = arith.constant 0 : index
    %11 = vector.load %arg5[%c0_6, %c0_7] : memref<16x1xf32, #tpu.memory_space<vmem>>, vector<16x1xf32>
    %12 = vector.broadcast %11 : vector<16x1xf32> to vector<16x128xf32>
    %13 = arith.addf %10, %12 : vector<16x128xf32>
    %c0_8 = arith.constant 0 : index
    %c0_9 = arith.constant 0 : index
    %14 = vector.load %arg2[%c0_8, %c0_9] : memref<16x128xf32, #tpu.memory_space<vmem>>, vector<16x128xf32>
    %15 = arith.addf %14, %13 : vector<16x128xf32>
    %c0_10 = arith.constant 0 : index
    %c0_11 = arith.constant 0 : index
    %16 = vector.load %arg6[%c0_10, %c0_11] : memref<16x128xf32, #tpu.memory_space<vmem>>, vector<16x128xf32>
    tpu.vector_store %arg6[%c0_10, %c0_11], %15 {strides = array<i32>} : memref<16x128xf32, #tpu.memory_space<vmem>>, vector<16x128xf32>,
    return
  }
  func.func @transform_0(%arg0: i32, %arg1: i32) -> (i32, i32) {
    %c0_i32 = arith.constant 0 : i32
    return %arg0, %arg1 : i32, i32
  }
  func.func @transform_1(%arg0: i32, %arg1: i32) -> (i32, i32) {
    %c0_i32 = arith.constant 0 : i32
    %c0_i32_0 = arith.constant 0 : i32
    return %c0_i32, %arg1 : i32, i32
  }
  func.func @transform_2(%arg0: i32, %arg1: i32) -> (i32, i32) {
    %c0_i32 = arith.constant 0 : i32
    %c0_i32_0 = arith.constant 0 : i32
    return %arg0, %c0_i32 : i32, i32
  }
  func.func @transform_3(%arg0: i32, %arg1: i32) -> (i32, i32) {
    %c0_i32 = arith.constant 0 : i32
    %c0_i32_0 = arith.constant 0 : i32
    return %arg0, %c0_i32 : i32, i32
  }
  func.func @transform_4(%arg0: i32, %arg1: i32) -> (i32, i32) {
    %c0_i32 = arith.constant 0 : i32
    return %arg0, %arg1 : i32, i32
  }
}

</mosaic_0001>

<llo_original>
// kernel: euclidean_position_encoding.1
$region0: #{euclidean_position_encoding.1}
  #allocation0 [shape = 'u32[]', space=smem, size = 0x4, offset = 0x4, fixed_abs, tag = 'smem constant byte address 0x4 - core index']
  #allocation1 [shape = 'u32[144,128]{1,0:T(1,128)}', space=vmem, size = 0x12000, scoped, tag = 'internal scratch']
  %s0 = inlined_call_operand.vmem [shape: f32[16,256], index: 0, kind: input, shape index: {}]
  %s1 = inlined_call_operand.vmem [shape: f32[2,256], index: 1, kind: input, shape index: {}]
  %s2 = inlined_call_operand.vmem [shape: f32[16,2], index: 2, kind: input, shape index: {}]
  %s3 = inlined_call_operand.vmem [shape: f32[16,1], index: 3, kind: input, shape index: {}]
  %s4 = inlined_call_operand.vmem [shape: f32[16,256], index: 4, kind: output, shape index: {}]
  %s5 = sld [smem:[#allocation0]]
  $region121: #{euclidean_position_encoding.1} parent=0
    _
  %s7 = ssub.s32 1, %s5
  %s8 = scalar_select 0, %s7, %s5
  $region1: #{euclidean_position_encoding.1} parent=0
    #allocation2 [shape = 'u8[16384]{0}', space=vmem, size = 0x4000, scoped, tag = 'input window, operand 0']
    #allocation3 [shape = 'u8[16384]{0}', space=vmem, size = 0x4000, scoped, tag = 'output window, operand 0']
    loop: start=0, step=1, limit=4
    $region2: #{euclidean_position_encoding.1} parent=1 // loop_pre_header
      _
    $region3: #{euclidean_position_encoding.1} parent=1 // loop_header
      %s10 = sphi 0, %s14
      %p11 = scmp.ge.s32.totalorder %s10, 4
      %s17 = sphi 0, %s29
      %s18 = sphi 0, %s25
      %s19 = sphi 0, %s17
      %s20 = sphi 0, %s18
      %s21 = sphi 0, %s19
      %s22 = sphi 0, %s20
      %s34 = sphi 0, %s36
      %s37 = sphi 0, %s34
      %s38 = sphi 0, %s37
      %s54 = sphi 0, %s38
      %s60 = sphi 0, %s62
      %s63 = sphi 0, %s60
      %s64 = sphi 0, %s63
      %s80 = sphi 0, %s64
      %s86 = sphi 0, %s88
      %s89 = sphi 0, %s86
      %s90 = sphi 0, %s89
      %s106 = sphi 0, %s90
      %s112 = sphi 0, %s114
      %s115 = sphi 0, %s112
      %s116 = sphi 0, %s115
      %s132 = sphi 0, %s116
      %s140 = sphi 0, %s142
      %s143 = sphi 0, %s140
      %s144 = sphi 0, %s143
      %s160 = sphi 0, %s144
    $region4: #{euclidean_position_encoding.1} parent=1 // loop_header_branch
      %13 = sbr.rel (%p11) target = $region8
    $region5: #{euclidean_position_encoding.1} parent=1 // loop_body
      %s15 = ssub.s32 %s10, 1
      %s16 = ssub.s32 %s10, 2
      %s23 = sadd.s32 1, %s18
      %p24 = scmp.ge.s32.totalorder %s23, 2
      %s25 = scalar_select %p24, 0, %s23
      %s26 = sadd.s32 1, %s17
      %s27 = scalar_select %p24, %s26, %s17
      %p28 = scmp.ge.s32.totalorder %s27, 1
      %s29 = scalar_select %p28, 0, %s27
      %s30 = ssub.s32 %s17, %s29
      %s31 = ssub.s32 %s18, %s25
      %s32 = sor.u32 %s30, %s31
      %p33 = scmp.eq.s32.totalorder %s32, 0
      %s35 = sadd.s32 %s34, 1
      %s36 = scalar_select %p33, %s34, %s35
      %p39 = pneg %p33
      %p40 = scmp.eq.s32.totalorder %s10, 1
      %p41 = por %p39, %p40
      %p42 = scmp.ne.s32.totalorder %s34, %s37
      %p43 = scmp.eq.s32.totalorder %s10, 0
      %p44 = por %p42, %p43
      %p45 = scmp.ne.s32.totalorder %s34, %s37
      %p46 = scmp.eq.s32.totalorder %s15, 1
      %p47 = por %p45, %p46
      %p48 = scmp.ne.s32.totalorder %s37, %s38
      %p49 = scmp.eq.s32.totalorder %s15, 0
      %p50 = por %p48, %p49
      %p51 = scmp.ne.s32.totalorder %s37, %s38
      %p52 = scmp.eq.s32.totalorder %s16, 1
      %p53 = por %p51, %p52
      %p55 = scmp.ne.s32.totalorder %s38, %s54
      %p56 = scmp.eq.s32.totalorder %s16, 0
      %p57 = por %p55, %p56
      %s58 = ssub.s32 %s18, %s25
      %p59 = scmp.eq.s32.totalorder %s58, 0
      %s61 = sadd.s32 %s60, 1
      %s62 = scalar_select %p59, %s60, %s61
      %p65 = pneg %p59
      %p66 = scmp.eq.s32.totalorder %s10, 1
      %p67 = por %p65, %p66
      %p68 = scmp.ne.s32.totalorder %s60, %s63
      %p69 = scmp.eq.s32.totalorder %s10, 0
      %p70 = por %p68, %p69
      %p71 = scmp.ne.s32.totalorder %s60, %s63
      %p72 = scmp.eq.s32.totalorder %s15, 1
      %p73 = por %p71, %p72
      %p74 = scmp.ne.s32.totalorder %s63, %s64
      %p75 = scmp.eq.s32.totalorder %s15, 0
      %p76 = por %p74, %p75
      %p77 = scmp.ne.s32.totalorder %s63, %s64
      %p78 = scmp.eq.s32.totalorder %s16, 1
      %p79 = por %p77, %p78
      %p81 = scmp.ne.s32.totalorder %s64, %s80
      %p82 = scmp.eq.s32.totalorder %s16, 0
      %p83 = por %p81, %p82
      %s84 = ssub.s32 %s17, %s29
      %p85 = scmp.eq.s32.totalorder %s84, 0
      %s87 = sadd.s32 %s86, 1
      %s88 = scalar_select %p85, %s86, %s87
      %p91 = pneg %p85
      %p92 = scmp.eq.s32.totalorder %s10, 1
      %p93 = por %p91, %p92
      %p94 = scmp.ne.s32.totalorder %s86, %s89
      %p95 = scmp.eq.s32.totalorder %s10, 0
      %p96 = por %p94, %p95
      %p97 = scmp.ne.s32.totalorder %s86, %s89
      %p98 = scmp.eq.s32.totalorder %s15, 1
      %p99 = por %p97, %p98
      %p100 = scmp.ne.s32.totalorder %s89, %s90
      %p101 = scmp.eq.s32.totalorder %s15, 0
      %p102 = por %p100, %p101
      %p103 = scmp.ne.s32.totalorder %s89, %s90
      %p104 = scmp.eq.s32.totalorder %s16, 1
      %p105 = por %p103, %p104
      %p107 = scmp.ne.s32.totalorder %s90, %s106
      %p108 = scmp.eq.s32.totalorder %s16, 0
      %p109 = por %p107, %p108
      %s110 = ssub.s32 %s17, %s29
      %p111 = scmp.eq.s32.totalorder %s110, 0
      %s113 = sadd.s32 %s112, 1
      %s114 = scalar_select %p111, %s112, %s113
      %p117 = pneg %p111
      %p118 = scmp.eq.s32.totalorder %s10, 1
      %p119 = por %p117, %p118
      %p120 = scmp.ne.s32.totalorder %s112, %s115
      %p121 = scmp.eq.s32.totalorder %s10, 0
      %p122 = por %p120, %p121
      %p123 = scmp.ne.s32.totalorder %s112, %s115
      %p124 = scmp.eq.s32.totalorder %s15, 1
      %p125 = por %p123, %p124
      %p126 = scmp.ne.s32.totalorder %s115, %s116
      %p127 = scmp.eq.s32.totalorder %s15, 0
      %p128 = por %p126, %p127
      %p129 = scmp.ne.s32.totalorder %s115, %s116
      %p130 = scmp.eq.s32.totalorder %s16, 1
      %p131 = por %p129, %p130
      %p133 = scmp.ne.s32.totalorder %s116, %s132
      %p134 = scmp.eq.s32.totalorder %s16, 0
      %p135 = por %p133, %p134
      %s136 = ssub.s32 %s17, %s29
      %s137 = ssub.s32 %s18, %s25
      %s138 = sor.u32 %s136, %s137
      %p139 = scmp.eq.s32.totalorder %s138, 0
      %s141 = sadd.s32 %s140, 1
      %s142 = scalar_select %p139, %s140, %s141
      %p145 = pneg %p139
      %p146 = scmp.eq.s32.totalorder %s10, 1
      %p147 = por %p145, %p146
      %p148 = scmp.ne.s32.totalorder %s140, %s143
      %p149 = scmp.eq.s32.totalorder %s10, 0
      %p150 = por %p148, %p149
      %p151 = scmp.ne.s32.totalorder %s140, %s143
      %p152 = scmp.eq.s32.totalorder %s15, 1
      %p153 = por %p151, %p152
      %p154 = scmp.ne.s32.totalorder %s143, %s144
      %p155 = scmp.eq.s32.totalorder %s15, 0
      %p156 = por %p154, %p155
      %p157 = scmp.ne.s32.totalorder %s143, %s144
      %p158 = scmp.eq.s32.totalorder %s16, 1
      %p159 = por %p157, %p158
      %p161 = scmp.ne.s32.totalorder %s144, %s160
      %p162 = scmp.eq.s32.totalorder %s16, 0
      %p163 = por %p161, %p162
      %p164 = scmp.le.s32.totalorder 1, %s10
      %p165 = scmp.lt.s32.totalorder %s10, 3
      %p166 = pnand %p164, %p165
      %p167 = pneg %p166
      // Predicated region
      $region9: #{euclidean_position_encoding.1} parent=5 // pred_check
        _
      $region10: #{euclidean_position_encoding.1} parent=5 // pred_check_branch
        %169 = sbr.rel (%p166) target = $region12
      $region11: #{euclidean_position_encoding.1} parent=5 // pred_region
        %s170 = ssub.s32 %s10, 1
        // Predicated region
        $region13: #{euclidean_position_encoding.1} parent=11 // pred_check
          %p171 = pneg %p102
        $region14: #{euclidean_position_encoding.1} parent=11 // pred_check_branch
          %173 = sbr.rel (%p171) target = $region16
        $region15: #{euclidean_position_encoding.1} parent=11 // pred_region
          %s174 = smul.u32 2, %s19
          %p175 = scmp.lt.s32.totalorder %s174, 1
          %s176 = scalar_select %p175, %s174, 1
          %s177 = smul.addr %s176, 8
          %s178 = scalar_lea.vmem %s2, %s177
          %s179 = smul.u32 2, %s19
        $region16: #{euclidean_position_encoding.1} parent=11 // pred_fallthru
          _
        // Predicated region
        $region17: #{euclidean_position_encoding.1} parent=11 // pred_check
          %p180 = pneg %p128
        $region18: #{euclidean_position_encoding.1} parent=11 // pred_check_branch
          %182 = sbr.rel (%p180) target = $region20
        $region19: #{euclidean_position_encoding.1} parent=11 // pred_region
          %s183 = smul.u32 2, %s19
          %p184 = scmp.lt.s32.totalorder %s183, 1
          %s185 = scalar_select %p184, %s183, 1
          %s186 = smul.addr %s185, 8
          %s187 = scalar_lea.vmem %s3, %s186
          %s188 = smul.u32 2, %s19
        $region20: #{euclidean_position_encoding.1} parent=11 // pred_fallthru
          _
      $region12: #{euclidean_position_encoding.1} parent=5 // pred_fallthru
        _
      %p189 = scmp.lt.s32.totalorder %s10, 2
      // Predicated region
      $region21: #{euclidean_position_encoding.1} parent=5 // pred_check
        %p190 = pneg %p189
      $region22: #{euclidean_position_encoding.1} parent=5 // pred_check_branch
        %192 = sbr.rel (%p190) target = $region24
      $region23: #{euclidean_position_encoding.1} parent=5 // pred_region
        // Predicated region
        $region25: #{euclidean_position_encoding.1} parent=23 // pred_check
          %p193 = pneg %p44
        $region26: #{euclidean_position_encoding.1} parent=23 // pred_check_branch
          %195 = sbr.rel (%p193) target = $region28
        $region27: #{euclidean_position_encoding.1} parent=23 // pred_region
          %s196 = sand.u32 %s34, 1
          %s197 = sand.u32 %s34, 1
          %s198 = smul.addr %s197, 16
          %s199 = scalar_lea.vmem [#allocation2], %s198
          %s200 = smul.u32 2, %s17
          %s201 = smul.addr %s200, 2
          %s202 = sadd.s32 %s18, %s201
          %s203 = smul.addr %s202, 8
          %s204 = scalar_lea.vmem %s0, %s203
          // Predicated region
          $region29: #{euclidean_position_encoding.1} parent=27 // pred_check
            _
          $region30: #{euclidean_position_encoding.1} parent=27 // pred_check_branch
            %206 = sbr.rel (0) target = $region32
          $region31: #{euclidean_position_encoding.1} parent=27 // pred_region
            // Predicated region
            $region33: #{euclidean_position_encoding.1} parent=31 // pred_check
              _
            $region34: #{euclidean_position_encoding.1} parent=31 // pred_check_branch
              %208 = sbr.rel (0) target = $region36
            $region35: #{euclidean_position_encoding.1} parent=31 // pred_region
              // Predicated region
              $region48: #{euclidean_position_encoding.1} parent=35 // pred_check
                _
              $region49: #{euclidean_position_encoding.1} parent=35 // pred_check_branch
                %225 = sbr.rel (0) target = $region51
              $region50: #{euclidean_position_encoding.1} parent=35 // pred_region
                loop: start=0, step=1, limit=1
                $region52: #{euclidean_position_encoding.1} parent=50 // loop_pre_header
                  _
                $region53: #{euclidean_position_encoding.1} parent=50 // loop_header
                  %s227 = sphi 0, %s231
                  %p228 = scmp.ge.s32.totalorder %s227, 1
                  %s232 = sphi %s204, %s204
                  %s233 = sphi %s199, %s199
                $region54: #{euclidean_position_encoding.1} parent=50 // loop_header_branch
                  %230 = sbr.rel (%p228) target = $region58
                $region55: #{euclidean_position_encoding.1} parent=50 // loop_body
                  %v234 = vld [vmem:[%s232] sm:$0xff]
                  %235 = vst [vmem:[%s233] sm:$0xff] %v234
                  %v236 = vld [vmem:[%s232 + $0x10] sm:$0xff]
                  %237 = vst [vmem:[%s233 + $0x8] sm:$0xff] %v236
                $region56: #{euclidean_position_encoding.1} parent=50 // loop_footer
                  %s231 = sadd.s32 1, %s227
                $region57: #{euclidean_position_encoding.1} parent=50 // loop_footer_branch
                  %226 = sbr.rel target = $region53
                $region58: #{euclidean_position_encoding.1} parent=50 // loop_exit
                  _
              $region51: #{euclidean_position_encoding.1} parent=35 // pred_fallthru
                _
              // Predicated region
              $region59: #{euclidean_position_encoding.1} parent=35 // pred_check
                _
              $region60: #{euclidean_position_encoding.1} parent=35 // pred_check_branch
                %239 = sbr.rel target = $region62
              $region61: #{euclidean_position_encoding.1} parent=35 // pred_region
                _
              $region62: #{euclidean_position_encoding.1} parent=35 // pred_fallthru
                _
            $region36: #{euclidean_position_encoding.1} parent=31 // pred_fallthru
              _
            // Predicated region
            $region37: #{euclidean_position_encoding.1} parent=31 // pred_check
              _
            $region38: #{euclidean_position_encoding.1} parent=31 // pred_check_branch
              %210 = sbr.rel target = $region40
            $region39: #{euclidean_position_encoding.1} parent=31 // pred_region
              loop: start=0, step=1, limit=1
              $region41: #{euclidean_position_encoding.1} parent=39 // loop_pre_header
                _
              $region42: #{euclidean_position_encoding.1} parent=39 // loop_header
                %s213 = sphi 0, %s217
                %p214 = scmp.ge.s32.totalorder %s213, 1
                %s218 = sphi %s204, %s204
                %s219 = sphi %s199, %s199
              $region43: #{euclidean_position_encoding.1} parent=39 // loop_header_branch
                %216 = sbr.rel (%p214) target = $region47
              $region44: #{euclidean_position_encoding.1} parent=39 // loop_body
                %v220 = vld [vmem:[%s218] sm:$0xff]
                %221 = vst [vmem:[%s219] sm:$0xff] %v220
                %v222 = vld [vmem:[%s218 + $0x10] sm:$0xff]
                %223 = vst [vmem:[%s219 + $0x8] sm:$0xff] %v222
              $region45: #{euclidean_position_encoding.1} parent=39 // loop_footer
                %s217 = sadd.s32 1, %s213
              $region46: #{euclidean_position_encoding.1} parent=39 // loop_footer_branch
                %212 = sbr.rel target = $region42
              $region47: #{euclidean_position_encoding.1} parent=39 // loop_exit
                _
            $region40: #{euclidean_position_encoding.1} parent=31 // pred_fallthru
              _
          $region32: #{euclidean_position_encoding.1} parent=27 // pred_fallthru
            _
          %240 = vnop
        $region28: #{euclidean_position_encoding.1} parent=23 // pred_fallthru
          _
        // Predicated region
        $region63: #{euclidean_position_encoding.1} parent=23 // pred_check
          %p241 = pneg %p70
        $region64: #{euclidean_position_encoding.1} parent=23 // pred_check_branch
          %243 = sbr.rel (%p241) target = $region66
        $region65: #{euclidean_position_encoding.1} parent=23 // pred_region
          %p244 = scmp.lt.s32.totalorder %s18, 1
          %s245 = scalar_select %p244, %s18, 1
          %s246 = smul.addr %s245, 2
          %s247 = scalar_lea.vmem %s1, %s246
        $region66: #{euclidean_position_encoding.1} parent=23 // pred_fallthru
          _
      $region24: #{euclidean_position_encoding.1} parent=5 // pred_fallthru
        _
      %p248 = scmp.le.s32.totalorder 1, %s10
      %p249 = scmp.lt.s32.totalorder %s10, 3
      %p250 = pnand %p248, %p249
      %p251 = pneg %p250
      // Predicated region
      $region67: #{euclidean_position_encoding.1} parent=5 // pred_check
        _
      $region68: #{euclidean_position_encoding.1} parent=5 // pred_check_branch
        %253 = sbr.rel (%p250) target = $region70
      $region69: #{euclidean_position_encoding.1} parent=5 // pred_region
        %s254 = ssub.s32 %s10, 1
        %s255 = sand.u32 %s37, 1
        %s256 = sand.u32 %s37, 1
        %s257 = smul.addr %s256, 16
        %s258 = scalar_lea.vmem [#allocation2], %s257
        // Predicated region
        $region71: #{euclidean_position_encoding.1} parent=69 // pred_check
          %p259 = pneg %p50
        $region72: #{euclidean_position_encoding.1} parent=69 // pred_check_branch
          %261 = sbr.rel (%p259) target = $region74
        $region73: #{euclidean_position_encoding.1} parent=69 // pred_region
          _
        $region74: #{euclidean_position_encoding.1} parent=69 // pred_fallthru
          _
        %s262 = sand.u32 %s37, 1
        %s263 = sand.u32 %s37, 1
        %s264 = smul.addr %s263, 16
        %s265 = scalar_lea.vmem [#allocation2], %s264
        %p266 = pneg %p50
        %p267 = pneg %p47
        %p268 = scmp.lt.s32.totalorder %s20, 1
        %s269 = scalar_select %p268, %s20, 1
        %s270 = smul.addr %s269, 2
        %s271 = scalar_lea.vmem %s1, %s270
        %p272 = pneg %p76
        %p273 = pneg %p73
        %s274 = smul.u32 2, %s19
        %p275 = scmp.lt.s32.totalorder %s274, 1
        %s276 = scalar_select %p275, %s274, 1
        %s277 = smul.addr %s276, 8
        %s278 = scalar_lea.vmem %s2, %s277
        %p279 = pneg %p102
        %p280 = pneg %p99
        %s281 = smul.u32 2, %s19
        %p282 = scmp.lt.s32.totalorder %s281, 1
        %s283 = scalar_select %p282, %s281, 1
        %s284 = smul.addr %s283, 8
        %s285 = scalar_lea.vmem %s3, %s284
        %p286 = pneg %p128
        %p287 = pneg %p125
        %p288 = pneg %p156
        %p289 = pneg %p153
        %s290 = sand.u32 %s143, 1
        %s291 = sand.u32 %s143, 1
        %s292 = smul.addr %s291, 16
        %s293 = scalar_lea.vmem [#allocation3], %s292
        %s294 = smul.u32 2, %s19
        %p295 = scmp.lt.s32.totalorder %s20, 1
        %s296 = scalar_select %p295, %s20, 1
        %s297 = smul.addr %s296, 2
        %s298 = scalar_lea.vmem %s1, %s297
        %s299 = smul.u32 2, %s19
        %p300 = scmp.lt.s32.totalorder %s299, 1
        %s301 = scalar_select %p300, %s299, 1
        %s302 = smul.addr %s301, 8
        %s303 = scalar_lea.vmem %s2, %s302
        %s304 = smul.u32 2, %s19
        %s305 = smul.u32 2, %s19
        %p306 = scmp.lt.s32.totalorder %s305, 1
        %s307 = scalar_select %p306, %s305, 1
        %s308 = smul.addr %s307, 8
        %s309 = scalar_lea.vmem %s3, %s308
        %s310 = smul.u32 2, %s19
        %s311 = smul.u32 2, %s19
        %v312 = vld [vmem:[%s298] sm:$0x1]
        %v313 = vld [vmem:[%s298 + $0x1] sm:$0x1]
        %v314 = vld [vmem:[%s303] sm:$0xff]
        %v315 = vld [vmem:[%s303 + $0x8] sm:$0xff]
        %317 = vset.pattern.permute.xlu0 0
        %318 = vperm.xlu0 %317, %v314
        %v319 = vpop.permute.xlu0 %318
        %322 = vset.pattern.permute.xlu0 0
        %323 = vperm.xlu0 %322, %v315
        %v324 = vpop.permute.xlu0 %323
        %v326 = vlaneseq
        %v327 = vshrl.u32 %v326, 7
        %v328 = vsub.s32 0, %v327
        %v329 = vrot.slane %v312, %v328
        %v330 = vmul.f32 %v319, %v329
        %v331 = vmul.f32 %v324, %v329
        %332 = vset.pattern.permute.xlu0 1
        %333 = vperm.xlu0 %332, %v314
        %v334 = vpop.permute.xlu0 %333
        %336 = vset.pattern.permute.xlu0 1
        %337 = vperm.xlu0 %336, %v315
        %v338 = vpop.permute.xlu0 %337
        %v340 = vlaneseq
        %v341 = vshrl.u32 %v340, 7
        %v342 = vsub.s32 0, %v341
        %v343 = vrot.slane %v313, %v342
        %v344 = vmul.f32 %v334, %v343
        %v345 = vmul.f32 %v338, %v343
        %v346 = vadd.f32 %v330, %v344
        %v347 = vadd.f32 %v331, %v345
        %v348 = vld [vmem:[%s309] sm:$0xff]
        %v349 = vld [vmem:[%s309 + $0x8] sm:$0xff]
        %351 = vset.pattern.permute.xlu0 0
        %352 = vperm.xlu0 %351, %v348
        %v353 = vpop.permute.xlu0 %352
        %356 = vset.pattern.permute.xlu0 0
        %357 = vperm.xlu0 %356, %v349
        %v358 = vpop.permute.xlu0 %357
        %v360 = vadd.f32 %v346, %v353
        %v361 = vadd.f32 %v347, %v358
        %v362 = vld [vmem:[%s258] sm:$0xff]
        %v363 = vld [vmem:[%s258 + $0x8] sm:$0xff]
        %v364 = vadd.f32 %v362, %v360
        %v365 = vadd.f32 %v363, %v361
        %366 = vst [vmem:[%s293] sm:$0xff] %v364
        %367 = vst [vmem:[%s293 + $0x8] sm:$0xff] %v365
        %s368 = sand.u32 %s143, 1
        %s369 = sand.u32 %s143, 1
        %s370 = smul.addr %s369, 16
        %s371 = scalar_lea.vmem [#allocation3], %s370
        // Predicated region
        $region75: #{euclidean_position_encoding.1} parent=69 // pred_check
          %p372 = pneg %p153
        $region76: #{euclidean_position_encoding.1} parent=69 // pred_check_branch
          %374 = sbr.rel (%p372) target = $region78
        $region77: #{euclidean_position_encoding.1} parent=69 // pred_region
          %s375 = smul.u32 2, %s19
          %s376 = smul.addr %s375, 2
          %s377 = sadd.s32 %s20, %s376
          %s378 = smul.addr %s377, 8
          %s379 = scalar_lea.vmem %s4, %s378
          // Predicated region
          $region79: #{euclidean_position_encoding.1} parent=77 // pred_check
            _
          $region80: #{euclidean_position_encoding.1} parent=77 // pred_check_branch
            %381 = sbr.rel (0) target = $region82
          $region81: #{euclidean_position_encoding.1} parent=77 // pred_region
            // Predicated region
            $region83: #{euclidean_position_encoding.1} parent=81 // pred_check
              _
            $region84: #{euclidean_position_encoding.1} parent=81 // pred_check_branch
              %383 = sbr.rel (0) target = $region86
            $region85: #{euclidean_position_encoding.1} parent=81 // pred_region
              // Predicated region
              $region98: #{euclidean_position_encoding.1} parent=85 // pred_check
                _
              $region99: #{euclidean_position_encoding.1} parent=85 // pred_check_branch
                %400 = sbr.rel (0) target = $region101
              $region100: #{euclidean_position_encoding.1} parent=85 // pred_region
                loop: start=0, step=1, limit=1
                $region102: #{euclidean_position_encoding.1} parent=100 // loop_pre_header
                  _
                $region103: #{euclidean_position_encoding.1} parent=100 // loop_header
                  %s402 = sphi 0, %s406
                  %p403 = scmp.ge.s32.totalorder %s402, 1
                  %s407 = sphi %s371, %s371
                  %s408 = sphi %s379, %s379
                $region104: #{euclidean_position_encoding.1} parent=100 // loop_header_branch
                  %405 = sbr.rel (%p403) target = $region108
                $region105: #{euclidean_position_encoding.1} parent=100 // loop_body
                  %v409 = vld [vmem:[%s407] sm:$0xff]
                  %410 = vst [vmem:[%s408] sm:$0xff] %v409
                  %v411 = vld [vmem:[%s407 + $0x8] sm:$0xff]
                  %412 = vst [vmem:[%s408 + $0x10] sm:$0xff] %v411
                $region106: #{euclidean_position_encoding.1} parent=100 // loop_footer
                  %s406 = sadd.s32 1, %s402
                $region107: #{euclidean_position_encoding.1} parent=100 // loop_footer_branch
                  %401 = sbr.rel target = $region103
                $region108: #{euclidean_position_encoding.1} parent=100 // loop_exit
                  _
              $region101: #{euclidean_position_encoding.1} parent=85 // pred_fallthru
                _
              // Predicated region
              $region109: #{euclidean_position_encoding.1} parent=85 // pred_check
                _
              $region110: #{euclidean_position_encoding.1} parent=85 // pred_check_branch
                %414 = sbr.rel target = $region112
              $region111: #{euclidean_position_encoding.1} parent=85 // pred_region
                _
              $region112: #{euclidean_position_encoding.1} parent=85 // pred_fallthru
                _
            $region86: #{euclidean_position_encoding.1} parent=81 // pred_fallthru
              _
            // Predicated region
            $region87: #{euclidean_position_encoding.1} parent=81 // pred_check
              _
            $region88: #{euclidean_position_encoding.1} parent=81 // pred_check_branch
              %385 = sbr.rel target = $region90
            $region89: #{euclidean_position_encoding.1} parent=81 // pred_region
              loop: start=0, step=1, limit=1
              $region91: #{euclidean_position_encoding.1} parent=89 // loop_pre_header
                _
              $region92: #{euclidean_position_encoding.1} parent=89 // loop_header
                %s388 = sphi 0, %s392
                %p389 = scmp.ge.s32.totalorder %s388, 1
                %s393 = sphi %s371, %s371
                %s394 = sphi %s379, %s379
              $region93: #{euclidean_position_encoding.1} parent=89 // loop_header_branch
                %391 = sbr.rel (%p389) target = $region97
              $region94: #{euclidean_position_encoding.1} parent=89 // loop_body
                %v395 = vld [vmem:[%s393] sm:$0xff]
                %396 = vst [vmem:[%s394] sm:$0xff] %v395
                %v397 = vld [vmem:[%s393 + $0x8] sm:$0xff]
                %398 = vst [vmem:[%s394 + $0x10] sm:$0xff] %v397
              $region95: #{euclidean_position_encoding.1} parent=89 // loop_footer
                %s392 = sadd.s32 1, %s388
              $region96: #{euclidean_position_encoding.1} parent=89 // loop_footer_branch
                %387 = sbr.rel target = $region92
              $region97: #{euclidean_position_encoding.1} parent=89 // loop_exit
                _
            $region90: #{euclidean_position_encoding.1} parent=81 // pred_fallthru
              _
          $region82: #{euclidean_position_encoding.1} parent=77 // pred_fallthru
            _
          %415 = vnop
        $region78: #{euclidean_position_encoding.1} parent=69 // pred_fallthru
          _
      $region70: #{euclidean_position_encoding.1} parent=5 // pred_fallthru
        _
      %p416 = scmp.le.s32.totalorder 2, %s10
      // Predicated region
      $region113: #{euclidean_position_encoding.1} parent=5 // pred_check
        %p417 = pneg %p416
      $region114: #{euclidean_position_encoding.1} parent=5 // pred_check_branch
        %419 = sbr.rel (%p417) target = $region116
      $region115: #{euclidean_position_encoding.1} parent=5 // pred_region
        %s420 = ssub.s32 %s10, 2
        // Predicated region
        $region117: #{euclidean_position_encoding.1} parent=115 // pred_check
          %p421 = pneg %p159
        $region118: #{euclidean_position_encoding.1} parent=115 // pred_check_branch
          %423 = sbr.rel (%p421) target = $region120
        $region119: #{euclidean_position_encoding.1} parent=115 // pred_region
          %s424 = sand.u32 %s144, 1
          %s425 = sand.u32 %s144, 1
          %s426 = smul.addr %s425, 16
          %s427 = scalar_lea.vmem [#allocation3], %s426
        $region120: #{euclidean_position_encoding.1} parent=115 // pred_fallthru
          _
      $region116: #{euclidean_position_encoding.1} parent=5 // pred_fallthru
        _
    $region6: #{euclidean_position_encoding.1} parent=1 // loop_footer
      %s14 = sadd.s32 1, %s10
    $region7: #{euclidean_position_encoding.1} parent=1 // loop_footer_branch
      %9 = sbr.rel target = $region3
    $region8: #{euclidean_position_encoding.1} parent=1 // loop_exit
      _

</llo_original>
